<compile_context>
chip_gen: v5e
topology: v5e:2x2
jax: 0.10.0
libtpu: 0.0.40
codegen_flags: <defaults>
</compile_context>

<pallas_src>
import jax
import jax.numpy as jnp
from jax import lax
from jax.experimental import pallas as pl
from jax.experimental.pallas import tpu as pltpu


def _round_up(x, m):
    return ((x + m - 1) // m) * m


def _model_kernel(tok_ref, table_ref, w1t_ref, b1_ref, w2t_ref, b2_ref,
                  out_ref):
    """One grid step == one batch tile of Bt rows.

    tok_ref  : VMEM (Bt, L_total) int32 token ids (s1 ++ s2) for this tile.
    table_ref: VMEM (V_pad, H) f32 — sos already folded in
               (table[v] = sos @ embed[v].reshape(W, H)); padded rows are 0.
    w1t_ref  : (H, H)       first linear weight, pre-transposed (y = x @ W.T).
    b1_ref   : (1, H)
    w2t_ref  : (H, OUT_PAD) second linear weight, pre-transposed, zero-padded.
    b2_ref   : (1, OUT_PAD)
    out_ref  : (Bt, OUT_PAD) lane-dense output tile for this grid step.
    """
    bt, l_total = tok_ref.shape
    v_pad = table_ref.shape[0]

    # ---- token-count matrix: counts[b, v] = #{l : tok[b, l] == v} ----------
    toks = tok_ref[...]                                           # (Bt, L) i32
    vocab_ids = lax.broadcasted_iota(jnp.int32, (bt, v_pad), 1)   # lane iota

    counts = jnp.zeros((bt, v_pad), jnp.float32)
    for l in range(l_total):          # static unroll — L_total is small
        counts = counts + (vocab_ids == toks[:, l:l + 1]).astype(jnp.float32)

    # ---- embedding sum as one MXU matmul:  acc = counts @ table ------------
    acc = jnp.dot(counts, table_ref[...],
                  preferred_element_type=jnp.float32)             # (Bt, H)

    # ---- clf: Linear(H, H) -> ReLU -> Linear(H, out_dim), batched ----------
    z = jnp.dot(acc, w1t_ref[...],
                preferred_element_type=jnp.float32) + b1_ref[...]
    z = jnp.maximum(z, 0.0)
    o = jnp.dot(z, w2t_ref[...],
                preferred_element_type=jnp.float32) + b2_ref[...]
    out_ref[...] = o.astype(out_ref.dtype)


def model_forward(s1, s2, params):
    embed = params["embed"]              # (V, W*H), padding_idx row is zeros
    sos = params["sos"]                  # (H,)
    w1, b1 = params["w1"], params["b1"]  # (H, H), (H,)
    w2, b2 = params["w2"], params["b2"]  # (out_dim, H), (out_dim,)

    B, L1 = s1.shape
    _, L2 = s2.shape
    H = sos.shape[0]
    W = H                                # module uses W == H == hidden_dim
    V = embed.shape[0]
    out_dim = w2.shape[0]
    assert embed.shape[1] == W * H, "embed inner dim must equal W*H"

    # ---- glue / parameter prep (runs once, tiny) ---------------------------
    # Fold sos into the embedding table (exact by linearity of the einsums).
    table = jnp.einsum('w,vwh->vh', sos, embed.reshape(V, W, H))   # (V, H)
    V_pad = _round_up(V, 128)            # lane-dense contraction dim for MXU
    if V_pad != V:
        table = jnp.pad(table, ((0, V_pad - V), (0, 0)))
    table = table.astype(jnp.float32)

    # Single concatenated token stream; pad batch up to the tile size.
    toks = jnp.concatenate([s1, s2], axis=1).astype(jnp.int32)     # (B, L1+L2)
    L_total = L1 + L2

    # Batch tile: sublane multiple; for bigger batches keep >= 2 tiles so both
    # v7x TensorCores get work, and cap at 256 rows (v6e MXU M-dim fill).
    b_ceil = _round_up(B, 8)
    if b_ceil <= 8:
        Bt = b_ceil
    else:
        Bt = min(256, _round_up(-(-b_ceil // 2), 8))
    B_pad = _round_up(B, Bt)
    if B_pad != B:
        # Padded rows compute garbage and are sliced off below.
        toks = jnp.pad(toks, ((0, B_pad - B), (0, 0)))

    OUT_PAD = _round_up(out_dim, 128)    # lane-dense output block
    w1t = w1.T.astype(jnp.float32)                                 # (H, H)
    b1r = b1.reshape(1, H).astype(jnp.float32)
    w2t_pad = jnp.zeros((H, OUT_PAD), jnp.float32).at[:, :out_dim].set(w2.T)
    b2_pad = jnp.zeros((1, OUT_PAD), jnp.float32).at[0, :out_dim].set(b2)

    grid = (B_pad // Bt,)

    cost = pl.CostEstimate(
        flops=2 * B_pad * (V_pad * H + H * H + H * OUT_PAD),
        transcendentals=0,
        bytes_accessed=4 * (toks.size + table.size + w1t.size + b1r.size
                            + w2t_pad.size + b2_pad.size + B_pad * OUT_PAD),
    )

    out_pad = pl.pallas_call(
        _model_kernel,
        out_shape=jax.ShapeDtypeStruct((B_pad, OUT_PAD), jnp.float32),
        grid_spec=pltpu.PrefetchScalarGridSpec(
            num_scalar_prefetch=0,
            grid=grid,
            in_specs=[
                pl.BlockSpec((Bt, L_total), lambda i: (i, 0)),     # tokens
                pl.BlockSpec((V_pad, H), lambda i: (0, 0)),        # folded table
                pl.BlockSpec((H, H), lambda i: (0, 0)),            # w1.T
                pl.BlockSpec((1, H), lambda i: (0, 0)),            # b1
                pl.BlockSpec((H, OUT_PAD), lambda i: (0, 0)),      # w2.T (padded)
                pl.BlockSpec((1, OUT_PAD), lambda i: (0, 0)),      # b2 (padded)
            ],
            out_specs=pl.BlockSpec((Bt, OUT_PAD), lambda i: (i, 0)),
            scratch_shapes=[],
        ),
        compiler_params=pltpu.CompilerParams(
            dimension_semantics=("parallel",)),
        cost_estimate=cost,
    )(toks, table, w1t, b1r, w2t_pad, b2_pad)

    return out_pad[:B, :out_dim]


if __name__ == "__main__":
    key = jax.random.PRNGKey(0)
    B, L1, L2 = 2, 8, 6
    hidden_dim = 32
    out_dim = 2
    vocab_size = 30
    pad_idx = 0

    ks = jax.random.split(key, 8)
    embed = jax.random.normal(ks[0], (vocab_size, hidden_dim * hidden_dim),
                              jnp.float32)
    embed = embed.at[pad_idx].set(0.0)   # nn.Embedding padding_idx semantics
    sos = jax.random.normal(ks[1], (hidden_dim,), jnp.float32)
    w1 = jax.random.normal(ks[2], (hidden_dim, hidden_dim),
                           jnp.float32) / jnp.sqrt(hidden_dim)
    b1 = jax.random.normal(ks[3], (hidden_dim,), jnp.float32) * 0.01
    w2 = jax.random.normal(ks[4], (out_dim, hidden_dim),
                           jnp.float32) / jnp.sqrt(hidden_dim)
    b2 = jax.random.normal(ks[5], (out_dim,), jnp.float32) * 0.01
    params = {"embed": embed, "sos": sos, "w1": w1, "b1": b1,
              "w2": w2, "b2": b2}

    s1 = jax.random.randint(ks[6], (B, L1), 0, vocab_size, dtype=jnp.int32)
    s2 = jax.random.randint(ks[7], (B, L2), 0, vocab_size, dtype=jnp.int32)

    out = model_forward(s1, s2, params)
    out = jax.block_until_ready(out)

    # Plain-JAX reference (mirrors the PyTorch forward exactly).
    e1 = embed[s1].reshape(B, L1, hidden_dim, hidden_dim)
    e2 = embed[s2].reshape(B, L2, hidden_dim, hidden_dim)
    r1 = jnp.einsum('w,blwh->blh', sos, e1).sum(axis=1)
    r2 = jnp.einsum('w,blwh->blh', sos, e2).sum(axis=1)
    hsum = r1 + r2
    zref = jnp.maximum(hsum @ w1.T + b1, 0.0)
    expected = zref @ w2.T + b2

    assert out.shape == (B, out_dim)
    assert jnp.allclose(out, expected, rtol=1e-3, atol=1e-2), (out, expected)
    print("KERNEL_OK")
</pallas_src>

<mosaic_0001>
module attributes {stable_mosaic.version = 11 : i64} {
  func.func @_model_kernel(%arg0: i32, %arg1: memref<8x14xi32, #tpu.memory_space<vmem>>, %arg2: memref<128x32xf32, #tpu.memory_space<vmem>>, %arg3: memref<32x32xf32, #tpu.memory_space<vmem>>, %arg4: memref<1x32xf32, #tpu.memory_space<vmem>>, %arg5: memref<32x128xf32, #tpu.memory_space<vmem>>, %arg6: memref<1x128xf32, #tpu.memory_space<vmem>>, %arg7: memref<8x128xf32, #tpu.memory_space<vmem>>) attributes {dimension_semantics = [#tpu.dimension_semantics<parallel>], iteration_bounds = array<i64: 1>, scalar_prefetch = 0 : i64, scratch_operands = 0 : i64, tpu.core_type = #tpu.core_type<tc>, window_params = [{transform_indices = @transform_0, window_bounds = array<i64: 8, 14>}, {pipeline_mode = #tpu.pipeline_mode<synchronous>, transform_indices = @transform_1, window_bounds = array<i64: 128, 32>}, {pipeline_mode = #tpu.pipeline_mode<synchronous>, transform_indices = @transform_2, window_bounds = array<i64: 32, 32>}, {pipeline_mode = #tpu.pipeline_mode<synchronous>, transform_indices = @transform_3, window_bounds = array<i64: 1, 32>}, {pipeline_mode = #tpu.pipeline_mode<synchronous>, transform_indices = @transform_4, window_bounds = array<i64: 32, 128>}, {pipeline_mode = #tpu.pipeline_mode<synchronous>, transform_indices = @transform_5, window_bounds = array<i64: 1, 128>}, {transform_indices = @transform_6, window_bounds = array<i64: 8, 128>}]} {
    %c0 = arith.constant 0 : index
    %c0_0 = arith.constant 0 : index
    %0 = vector.load %arg1[%c0, %c0_0] : memref<8x14xi32, #tpu.memory_space<vmem>>, vector<8x14xi32>
    %1 = tpu.iota {dimensions = array<i32: 1>} : vector<8x128xi32>
    %cst = arith.constant 0.000000e+00 : f32
    %2 = vector.broadcast %cst : f32 to vector<8x128xf32>
    %3 = vector.extract_strided_slice %0 {offsets = [0, 0], sizes = [8, 1], strides = [1, 1]} : vector<8x14xi32> to vector<8x1xi32>
    %4 = vector.broadcast %3 : vector<8x1xi32> to vector<8x128xi32>
    %5 = arith.cmpi eq, %1, %4 : vector<8x128xi32>
    %6 = arith.extui %5 : vector<8x128xi1> to vector<8x128xi32>
    %7 = arith.sitofp %6 : vector<8x128xi32> to vector<8x128xf32>
    %8 = arith.addf %2, %7 : vector<8x128xf32>
    %9 = vector.extract_strided_slice %0 {offsets = [0, 1], sizes = [8, 1], strides = [1, 1]} : vector<8x14xi32> to vector<8x1xi32>
    %10 = vector.broadcast %9 : vector<8x1xi32> to vector<8x128xi32>
    %11 = arith.cmpi eq, %1, %10 : vector<8x128xi32>
    %12 = arith.extui %11 : vector<8x128xi1> to vector<8x128xi32>
    %13 = arith.sitofp %12 : vector<8x128xi32> to vector<8x128xf32>
    %14 = arith.addf %8, %13 : vector<8x128xf32>
    %15 = vector.extract_strided_slice %0 {offsets = [0, 2], sizes = [8, 1], strides = [1, 1]} : vector<8x14xi32> to vector<8x1xi32>
    %16 = vector.broadcast %15 : vector<8x1xi32> to vector<8x128xi32>
    %17 = arith.cmpi eq, %1, %16 : vector<8x128xi32>
    %18 = arith.extui %17 : vector<8x128xi1> to vector<8x128xi32>
    %19 = arith.sitofp %18 : vector<8x128xi32> to vector<8x128xf32>
    %20 = arith.addf %14, %19 : vector<8x128xf32>
    %21 = vector.extract_strided_slice %0 {offsets = [0, 3], sizes = [8, 1], strides = [1, 1]} : vector<8x14xi32> to vector<8x1xi32>
    %22 = vector.broadcast %21 : vector<8x1xi32> to vector<8x128xi32>
    %23 = arith.cmpi eq, %1, %22 : vector<8x128xi32>
    %24 = arith.extui %23 : vector<8x128xi1> to vector<8x128xi32>
    %25 = arith.sitofp %24 : vector<8x128xi32> to vector<8x128xf32>
    %26 = arith.addf %20, %25 : vector<8x128xf32>
    %27 = vector.extract_strided_slice %0 {offsets = [0, 4], sizes = [8, 1], strides = [1, 1]} : vector<8x14xi32> to vector<8x1xi32>
    %28 = vector.broadcast %27 : vector<8x1xi32> to vector<8x128xi32>
    %29 = arith.cmpi eq, %1, %28 : vector<8x128xi32>
    %30 = arith.extui %29 : vector<8x128xi1> to vector<8x128xi32>
    %31 = arith.sitofp %30 : vector<8x128xi32> to vector<8x128xf32>
    %32 = arith.addf %26, %31 : vector<8x128xf32>
    %33 = vector.extract_strided_slice %0 {offsets = [0, 5], sizes = [8, 1], strides = [1, 1]} : vector<8x14xi32> to vector<8x1xi32>
    %34 = vector.broadcast %33 : vector<8x1xi32> to vector<8x128xi32>
    %35 = arith.cmpi eq, %1, %34 : vector<8x128xi32>
    %36 = arith.extui %35 : vector<8x128xi1> to vector<8x128xi32>
    %37 = arith.sitofp %36 : vector<8x128xi32> to vector<8x128xf32>
    %38 = arith.addf %32, %37 : vector<8x128xf32>
    %39 = vector.extract_strided_slice %0 {offsets = [0, 6], sizes = [8, 1], strides = [1, 1]} : vector<8x14xi32> to vector<8x1xi32>
    %40 = vector.broadcast %39 : vector<8x1xi32> to vector<8x128xi32>
    %41 = arith.cmpi eq, %1, %40 : vector<8x128xi32>
    %42 = arith.extui %41 : vector<8x128xi1> to vector<8x128xi32>
    %43 = arith.sitofp %42 : vector<8x128xi32> to vector<8x128xf32>
    %44 = arith.addf %38, %43 : vector<8x128xf32>
    %45 = vector.extract_strided_slice %0 {offsets = [0, 7], sizes = [8, 1], strides = [1, 1]} : vector<8x14xi32> to vector<8x1xi32>
    %46 = vector.broadcast %45 : vector<8x1xi32> to vector<8x128xi32>
    %47 = arith.cmpi eq, %1, %46 : vector<8x128xi32>
    %48 = arith.extui %47 : vector<8x128xi1> to vector<8x128xi32>
    %49 = arith.sitofp %48 : vector<8x128xi32> to vector<8x128xf32>
    %50 = arith.addf %44, %49 : vector<8x128xf32>
    %51 = vector.extract_strided_slice %0 {offsets = [0, 8], sizes = [8, 1], strides = [1, 1]} : vector<8x14xi32> to vector<8x1xi32>
    %52 = vector.broadcast %51 : vector<8x1xi32> to vector<8x128xi32>
    %53 = arith.cmpi eq, %1, %52 : vector<8x128xi32>
    %54 = arith.extui %53 : vector<8x128xi1> to vector<8x128xi32>
    %55 = arith.sitofp %54 : vector<8x128xi32> to vector<8x128xf32>
    %56 = arith.addf %50, %55 : vector<8x128xf32>
    %57 = vector.extract_strided_slice %0 {offsets = [0, 9], sizes = [8, 1], strides = [1, 1]} : vector<8x14xi32> to vector<8x1xi32>
    %58 = vector.broadcast %57 : vector<8x1xi32> to vector<8x128xi32>
    %59 = arith.cmpi eq, %1, %58 : vector<8x128xi32>
    %60 = arith.extui %59 : vector<8x128xi1> to vector<8x128xi32>
    %61 = arith.sitofp %60 : vector<8x128xi32> to vector<8x128xf32>
    %62 = arith.addf %56, %61 : vector<8x128xf32>
    %63 = vector.extract_strided_slice %0 {offsets = [0, 10], sizes = [8, 1], strides = [1, 1]} : vector<8x14xi32> to vector<8x1xi32>
    %64 = vector.broadcast %63 : vector<8x1xi32> to vector<8x128xi32>
    %65 = arith.cmpi eq, %1, %64 : vector<8x128xi32>
    %66 = arith.extui %65 : vector<8x128xi1> to vector<8x128xi32>
    %67 = arith.sitofp %66 : vector<8x128xi32> to vector<8x128xf32>
    %68 = arith.addf %62, %67 : vector<8x128xf32>
    %69 = vector.extract_strided_slice %0 {offsets = [0, 11], sizes = [8, 1], strides = [1, 1]} : vector<8x14xi32> to vector<8x1xi32>
    %70 = vector.broadcast %69 : vector<8x1xi32> to vector<8x128xi32>
    %71 = arith.cmpi eq, %1, %70 : vector<8x128xi32>
    %72 = arith.extui %71 : vector<8x128xi1> to vector<8x128xi32>
    %73 = arith.sitofp %72 : vector<8x128xi32> to vector<8x128xf32>
    %74 = arith.addf %68, %73 : vector<8x128xf32>
    %75 = vector.extract_strided_slice %0 {offsets = [0, 12], sizes = [8, 1], strides = [1, 1]} : vector<8x14xi32> to vector<8x1xi32>
    %76 = vector.broadcast %75 : vector<8x1xi32> to vector<8x128xi32>
    %77 = arith.cmpi eq, %1, %76 : vector<8x128xi32>
    %78 = arith.extui %77 : vector<8x128xi1> to vector<8x128xi32>
    %79 = arith.sitofp %78 : vector<8x128xi32> to vector<8x128xf32>
    %80 = arith.addf %74, %79 : vector<8x128xf32>
    %81 = vector.extract_strided_slice %0 {offsets = [0, 13], sizes = [8, 1], strides = [1, 1]} : vector<8x14xi32> to vector<8x1xi32>
    %82 = vector.broadcast %81 : vector<8x1xi32> to vector<8x128xi32>
    %83 = arith.cmpi eq, %1, %82 : vector<8x128xi32>
    %84 = arith.extui %83 : vector<8x128xi1> to vector<8x128xi32>
    %85 = arith.sitofp %84 : vector<8x128xi32> to vector<8x128xf32>
    %86 = arith.addf %80, %85 : vector<8x128xf32>
    %c0_1 = arith.constant 0 : index
    %c0_2 = arith.constant 0 : index
    %87 = vector.load %arg2[%c0_1, %c0_2] : memref<128x32xf32, #tpu.memory_space<vmem>>, vector<128x32xf32>
    %cst_3 = arith.constant dense<0.000000e+00> : vector<8x32xf32>
    %88 = tpu.matmul %86, %87, %cst_3 {dimension_numbers = #tpu.dot_dimension_numbers<[1], [0], [0], [1], [0, 0, 1, 1], [], []>} : vector<8x128xf32>, vector<128x32xf32>, vector<8x32xf32> -> vector<8x32xf32>
    %c0_4 = arith.constant 0 : index
    %c0_5 = arith.constant 0 : index
    %89 = vector.load %arg3[%c0_4, %c0_5] : memref<32x32xf32, #tpu.memory_space<vmem>>, vector<32x32xf32>
    %cst_6 = arith.constant dense<0.000000e+00> : vector<8x32xf32>
    %90 = tpu.matmul %88, %89, %cst_6 {dimension_numbers = #tpu.dot_dimension_numbers<[1], [0], [0], [1], [0, 0, 1, 1], [], []>} : vector<8x32xf32>, vector<32x32xf32>, vector<8x32xf32> -> vector<8x32xf32>
    %c0_7 = arith.constant 0 : index
    %c0_8 = arith.constant 0 : index
    %91 = vector.load %arg4[%c0_7, %c0_8] : memref<1x32xf32, #tpu.memory_space<vmem>>, vector<1x32xf32>
    %92 = vector.broadcast %91 : vector<1x32xf32> to vector<8x32xf32>
    %93 = arith.addf %90, %92 : vector<8x32xf32>
    %cst_9 = arith.constant 0.000000e+00 : f32
    %94 = vector.broadcast %cst_9 : f32 to vector<8x32xf32>
    %95 = arith.maximumf %93, %94 : vector<8x32xf32>
    %c0_10 = arith.constant 0 : index
    %c0_11 = arith.constant 0 : index
    %96 = vector.load %arg5[%c0_10, %c0_11] : memref<32x128xf32, #tpu.memory_space<vmem>>, vector<32x128xf32>
    %cst_12 = arith.constant dense<0.000000e+00> : vector<8x128xf32>
    %97 = tpu.matmul %95, %96, %cst_12 {dimension_numbers = #tpu.dot_dimension_numbers<[1], [0], [0], [1], [0, 0, 1, 1], [], []>} : vector<8x32xf32>, vector<32x128xf32>, vector<8x128xf32> -> vector<8x128xf32>
    %c0_13 = arith.constant 0 : index
    %c0_14 = arith.constant 0 : index
    %98 = vector.load %arg6[%c0_13, %c0_14] : memref<1x128xf32, #tpu.memory_space<vmem>>, vector<1x128xf32>
    %99 = vector.broadcast %98 : vector<1x128xf32> to vector<8x128xf32>
    %100 = arith.addf %97, %99 : vector<8x128xf32>
    %c0_15 = arith.constant 0 : index
    %c0_16 = arith.constant 0 : index
    %101 = vector.load %arg7[%c0_15, %c0_16] : memref<8x128xf32, #tpu.memory_space<vmem>>, vector<8x128xf32>
    tpu.vector_store %arg7[%c0_15, %c0_16], %100 {strides = array<i32>} : memref<8x128xf32, #tpu.memory_space<vmem>>, vector<8x128xf32>,
    return
  }
  func.func @transform_0(%arg0: i32) -> (i32, i32) {
    %c0_i32 = arith.constant 0 : i32
    %c0_i32_0 = arith.constant 0 : i32
    return %arg0, %c0_i32 : i32, i32
  }
  func.func @transform_1(%arg0: i32) -> (i32, i32) {
    %c0_i32 = arith.constant 0 : i32
    %c0_i32_0 = arith.constant 0 : i32
    %c0_i32_1 = arith.constant 0 : i32
    return %c0_i32, %c0_i32_0 : i32, i32
  }
  func.func @transform_2(%arg0: i32) -> (i32, i32) {
    %c0_i32 = arith.constant 0 : i32
    %c0_i32_0 = arith.constant 0 : i32
    %c0_i32_1 = arith.constant 0 : i32
    return %c0_i32, %c0_i32_0 : i32, i32
  }
  func.func @transform_3(%arg0: i32) -> (i32, i32) {
    %c0_i32 = arith.constant 0 : i32
    %c0_i32_0 = arith.constant 0 : i32
    %c0_i32_1 = arith.constant 0 : i32
    return %c0_i32, %c0_i32_0 : i32, i32
  }
  func.func @transform_4(%arg0: i32) -> (i32, i32) {
    %c0_i32 = arith.constant 0 : i32
    %c0_i32_0 = arith.constant 0 : i32
    %c0_i32_1 = arith.constant 0 : i32
    return %c0_i32, %c0_i32_0 : i32, i32
  }
  func.func @transform_5(%arg0: i32) -> (i32, i32) {
    %c0_i32 = arith.constant 0 : i32
    %c0_i32_0 = arith.constant 0 : i32
    %c0_i32_1 = arith.constant 0 : i32
    return %c0_i32, %c0_i32_0 : i32, i32
  }
  func.func @transform_6(%arg0: i32) -> (i32, i32) {
    %c0_i32 = arith.constant 0 : i32
    %c0_i32_0 = arith.constant 0 : i32
    return %arg0, %c0_i32 : i32, i32
  }
}

</mosaic_0001>

<llo_original>
// kernel: tpu_custom_call.1
$region0: #{tpu_custom_call.1}
  #allocation0 [shape = 'u32[]', space=smem, size = 0x4, offset = 0x4, fixed_abs, tag = 'smem constant byte address 0x4 - core index']
  #allocation1 [shape = 'u32[72,128]{1,0:T(1,128)}', space=vmem, size = 0x9000, scoped, tag = 'internal scratch']
  %s0 = inlined_call_operand.vmem [shape: s32[8,14], index: 0, kind: input, shape index: {}]
  %s1 = inlined_call_operand.vmem [shape: f32[128,32], index: 1, kind: input, shape index: {}]
  %s2 = inlined_call_operand.vmem [shape: f32[32,32], index: 2, kind: input, shape index: {}]
  %s3 = inlined_call_operand.vmem [shape: f32[1,32], index: 3, kind: input, shape index: {}]
  %s4 = inlined_call_operand.vmem [shape: f32[32,128], index: 4, kind: input, shape index: {}]
  %s5 = inlined_call_operand.vmem [shape: f32[1,128], index: 5, kind: input, shape index: {}]
  %s6 = inlined_call_operand.hbm [shape: f32[8,128], index: 6, kind: output, shape index: {}]
  %s7 = sld [smem:[#allocation0]]
  $region34: #{tpu_custom_call.1} parent=0
    _
  %s9 = ssub.s32 1, %s7
  %s10 = scalar_select 0, %s9, %s7
  $region1: #{tpu_custom_call.1} parent=0
    #allocation2 [shape = 'u8[4096]{0}', space=vmem, size = 0x1000, scoped, tag = 'output window, operand 0, single buffered']
    #allocation3 [shape = 's32[1]{0}', space=sflag, size = 0x4, scoped, tag = 'scoped memory for tpu_custom_call.1']
    %11 = vsyncpa [#allocation3], 0
    // Predicated region
    $region2: #{tpu_custom_call.1} parent=1 // pred_check
      _
    $region3: #{tpu_custom_call.1} parent=1 // pred_check_branch
      %13 = sbr.rel (0) target = $region5
    $region4: #{tpu_custom_call.1} parent=1 // pred_region
      _
    $region5: #{tpu_custom_call.1} parent=1 // pred_fallthru
      _
    // Predicated region
    $region6: #{tpu_custom_call.1} parent=1 // pred_check
      _
    $region7: #{tpu_custom_call.1} parent=1 // pred_check_branch
      %15 = sbr.rel (0) target = $region9
    $region8: #{tpu_custom_call.1} parent=1 // pred_region
      _
    $region9: #{tpu_custom_call.1} parent=1 // pred_fallthru
      _
    // Predicated region
    $region10: #{tpu_custom_call.1} parent=1 // pred_check
      _
    $region11: #{tpu_custom_call.1} parent=1 // pred_check_branch
      %17 = sbr.rel (0) target = $region13
    $region12: #{tpu_custom_call.1} parent=1 // pred_region
      _
    $region13: #{tpu_custom_call.1} parent=1 // pred_fallthru
      _
    // Predicated region
    $region14: #{tpu_custom_call.1} parent=1 // pred_check
      _
    $region15: #{tpu_custom_call.1} parent=1 // pred_check_branch
      %19 = sbr.rel (0) target = $region17
    $region16: #{tpu_custom_call.1} parent=1 // pred_region
      _
    $region17: #{tpu_custom_call.1} parent=1 // pred_fallthru
      _
    // Predicated region
    $region18: #{tpu_custom_call.1} parent=1 // pred_check
      _
    $region19: #{tpu_custom_call.1} parent=1 // pred_check_branch
      %21 = sbr.rel (0) target = $region21
    $region20: #{tpu_custom_call.1} parent=1 // pred_region
      _
    $region21: #{tpu_custom_call.1} parent=1 // pred_fallthru
      _
    // Predicated region
    $region22: #{tpu_custom_call.1} parent=1 // pred_check
      _
    $region23: #{tpu_custom_call.1} parent=1 // pred_check_branch
      %23 = sbr.rel (0) target = $region25
    $region24: #{tpu_custom_call.1} parent=1 // pred_region
      _
    $region25: #{tpu_custom_call.1} parent=1 // pred_fallthru
      _
    %v24 = vld [vmem:[%s0] sm:$0xff]
    %v25 = vlaneseq
    %v26 = vand.u32 %v25, 127
    %27 = vset.pattern.permute.xlu0 0
    %28 = vperm.xlu0 %27, %v24
    %v29 = vpop.permute.xlu0 %28
    %vm30 = vcmp.eq.s32.totalorder %v26, %v29
    %v31 = vsel %vm30, 1, 0
    %v32 = vcvt.s32.f32 %v31
    %v33 = vadd.f32 %v32, 0.0
    %34 = vset.pattern.permute.xlu0 1
    %35 = vperm.xlu0 %34, %v24
    %v36 = vpop.permute.xlu0 %35
    %vm37 = vcmp.eq.s32.totalorder %v26, %v36
    %v38 = vsel %vm37, 1, 0
    %v39 = vcvt.s32.f32 %v38
    %v40 = vadd.f32 %v33, %v39
    %41 = vset.pattern.permute.xlu0 2
    %42 = vperm.xlu0 %41, %v24
    %v43 = vpop.permute.xlu0 %42
    %vm44 = vcmp.eq.s32.totalorder %v26, %v43
    %v45 = vsel %vm44, 1, 0
    %v46 = vcvt.s32.f32 %v45
    %v47 = vadd.f32 %v40, %v46
    %48 = vset.pattern.permute.xlu0 3
    %49 = vperm.xlu0 %48, %v24
    %v50 = vpop.permute.xlu0 %49
    %vm51 = vcmp.eq.s32.totalorder %v26, %v50
    %v52 = vsel %vm51, 1, 0
    %v53 = vcvt.s32.f32 %v52
    %v54 = vadd.f32 %v47, %v53
    %55 = vset.pattern.permute.xlu0 4
    %56 = vperm.xlu0 %55, %v24
    %v57 = vpop.permute.xlu0 %56
    %vm58 = vcmp.eq.s32.totalorder %v26, %v57
    %v59 = vsel %vm58, 1, 0
    %v60 = vcvt.s32.f32 %v59
    %v61 = vadd.f32 %v54, %v60
    %62 = vset.pattern.permute.xlu0 5
    %63 = vperm.xlu0 %62, %v24
    %v64 = vpop.permute.xlu0 %63
    %vm65 = vcmp.eq.s32.totalorder %v26, %v64
    %v66 = vsel %vm65, 1, 0
    %v67 = vcvt.s32.f32 %v66
    %v68 = vadd.f32 %v61, %v67
    %69 = vset.pattern.permute.xlu0 6
    %70 = vperm.xlu0 %69, %v24
    %v71 = vpop.permute.xlu0 %70
    %vm72 = vcmp.eq.s32.totalorder %v26, %v71
    %v73 = vsel %vm72, 1, 0
    %v74 = vcvt.s32.f32 %v73
    %v75 = vadd.f32 %v68, %v74
    %76 = vset.pattern.permute.xlu0 7
    %77 = vperm.xlu0 %76, %v24
    %v78 = vpop.permute.xlu0 %77
    %vm79 = vcmp.eq.s32.totalorder %v26, %v78
    %v80 = vsel %vm79, 1, 0
    %v81 = vcvt.s32.f32 %v80
    %v82 = vadd.f32 %v75, %v81
    %83 = vset.pattern.permute.xlu0 8
    %84 = vperm.xlu0 %83, %v24
    %v85 = vpop.permute.xlu0 %84
    %vm86 = vcmp.eq.s32.totalorder %v26, %v85
    %v87 = vsel %vm86, 1, 0
    %v88 = vcvt.s32.f32 %v87
    %v89 = vadd.f32 %v82, %v88
    %90 = vset.pattern.permute.xlu0 9
    %91 = vperm.xlu0 %90, %v24
    %v92 = vpop.permute.xlu0 %91
    %vm93 = vcmp.eq.s32.totalorder %v26, %v92
    %v94 = vsel %vm93, 1, 0
    %v95 = vcvt.s32.f32 %v94
    %v96 = vadd.f32 %v89, %v95
    %97 = vset.pattern.permute.xlu0 10
    %98 = vperm.xlu0 %97, %v24
    %v99 = vpop.permute.xlu0 %98
    %vm100 = vcmp.eq.s32.totalorder %v26, %v99
    %v101 = vsel %vm100, 1, 0
    %v102 = vcvt.s32.f32 %v101
    %v103 = vadd.f32 %v96, %v102
    %104 = vset.pattern.permute.xlu0 11
    %105 = vperm.xlu0 %104, %v24
    %v106 = vpop.permute.xlu0 %105
    %vm107 = vcmp.eq.s32.totalorder %v26, %v106
    %v108 = vsel %vm107, 1, 0
    %v109 = vcvt.s32.f32 %v108
    %v110 = vadd.f32 %v103, %v109
    %111 = vset.pattern.permute.xlu0 12
    %112 = vperm.xlu0 %111, %v24
    %v113 = vpop.permute.xlu0 %112
    %vm114 = vcmp.eq.s32.totalorder %v26, %v113
    %v115 = vsel %vm114, 1, 0
    %v116 = vcvt.s32.f32 %v115
    %v117 = vadd.f32 %v110, %v116
    %118 = vset.pattern.permute.xlu0 13
    %119 = vperm.xlu0 %118, %v24
    %v120 = vpop.permute.xlu0 %119
    %vm121 = vcmp.eq.s32.totalorder %v26, %v120
    %v122 = vsel %vm121, 1, 0
    %v123 = vcvt.s32.f32 %v122
    %v124 = vadd.f32 %v117, %v123
    %v125 = vld [vmem:[%s1] sm:$0xff]
    %v126 = vld [vmem:[%s1 + $0x8] sm:$0xff]
    %v127 = vld [vmem:[%s1 + $0x10] sm:$0xff]
    %v128 = vld [vmem:[%s1 + $0x18] sm:$0xff]
    %v129 = vld [vmem:[%s1 + $0x20] sm:$0xff]
    %v130 = vld [vmem:[%s1 + $0x28] sm:$0xff]
    %v131 = vld [vmem:[%s1 + $0x30] sm:$0xff]
    %v132 = vld [vmem:[%s1 + $0x38] sm:$0xff]
    %v133 = vld [vmem:[%s1 + $0x40] sm:$0xff]
    %v134 = vld [vmem:[%s1 + $0x48] sm:$0xff]
    %v135 = vld [vmem:[%s1 + $0x50] sm:$0xff]
    %v136 = vld [vmem:[%s1 + $0x58] sm:$0xff]
    %v137 = vld [vmem:[%s1 + $0x60] sm:$0xff]
    %v138 = vld [vmem:[%s1 + $0x68] sm:$0xff]
    %v139 = vld [vmem:[%s1 + $0x70] sm:$0xff]
    %v140 = vld [vmem:[%s1 + $0x78] sm:$0xff]
    %141 = vmatpush.msra.mxu0 %v140
    %142 = vmatpush.msra.mxu0 %v139
    %143 = vmatpush.msra.mxu0 %v138
    %144 = vmatpush.msra.mxu0 %v137
    %145 = vmatpush.msra.mxu0 %v136
    %146 = vmatpush.msra.mxu0 %v135
    %147 = vmatpush.msra.mxu0 %v134
    %148 = vmatpush.msra.mxu0 %v133
    %149 = vmatpush.msra.mxu0 %v132
    %150 = vmatpush.msra.mxu0 %v131
    %151 = vmatpush.msra.mxu0 %v130
    %152 = vmatpush.msra.mxu0 %v129
    %153 = vmatpush.msra.mxu0 %v128
    %154 = vmatpush.msra.mxu0 %v127
    %155 = vmatpush.msra.mxu0 %v126
    %156 = vmatpush.msra.mxu0 %v125
    %157 = vmatmul.f32.gmra.mxu0 %v124
    %v158 = vpop.f32.mrf.mxu0
    %v159 = vadd.f32 0.0, %v158
    %160 = vdwg.mxu0
    %v161 = vld [vmem:[%s2] sm:$0xff]
    %v162 = vld [vmem:[%s2 + $0x8] sm:$0xff]
    %v163 = vld [vmem:[%s2 + $0x10] sm:$0xff]
    %v164 = vld [vmem:[%s2 + $0x18] sm:$0xff]
    %v165 = vld [vmem:[%s3] sm:$0x1]
    %v167 = vperm.slane %v165, 0
    %vm169 = vcmask 261120
    %v171 = vsel %vm169, %v159, 0
    %173 = vmatpush.msra.mxu0 0.0
    %174 = vmatpush.msra.mxu0 0.0
    %175 = vmatpush.msra.mxu0 0.0
    %176 = vmatpush.msra.mxu0 0.0
    %177 = vmatpush.msra.mxu0 0.0
    %178 = vmatpush.msra.mxu0 0.0
    %179 = vmatpush.msra.mxu0 0.0
    %180 = vmatpush.msra.mxu0 0.0
    %181 = vmatpush.msra.mxu0 0.0
    %182 = vmatpush.msra.mxu0 0.0
    %183 = vmatpush.msra.mxu0 0.0
    %184 = vmatpush.msra.mxu0 0.0
    %185 = vmatpush.msra.mxu0 %v164
    %186 = vmatpush.msra.mxu0 %v163
    %187 = vmatpush.msra.mxu0 %v162
    %188 = vmatpush.msra.mxu0 %v161
    %189 = vmatmul.f32.gmra.mxu0 %v171
    %v190 = vpop.f32.mrf.mxu0
    %v191 = vadd.f32 %v167, %v190
    %192 = vdwg.mxu0
    %v193 = vmax.f32 %v191, 0.0
    %v194 = vld [vmem:[%s4] sm:$0xff]
    %v195 = vld [vmem:[%s4 + $0x8] sm:$0xff]
    %v196 = vld [vmem:[%s4 + $0x10] sm:$0xff]
    %v197 = vld [vmem:[%s4 + $0x18] sm:$0xff]
    %v198 = vld [vmem:[%s5] sm:$0x1]
    %v200 = vperm.slane %v198, 0
    %v203 = vsel %vm169, %v193, 0
    %205 = vmatpush.msra.mxu0 0.0
    %206 = vmatpush.msra.mxu0 0.0
    %207 = vmatpush.msra.mxu0 0.0
    %208 = vmatpush.msra.mxu0 0.0
    %209 = vmatpush.msra.mxu0 0.0
    %210 = vmatpush.msra.mxu0 0.0
    %211 = vmatpush.msra.mxu0 0.0
    %212 = vmatpush.msra.mxu0 0.0
    %213 = vmatpush.msra.mxu0 0.0
    %214 = vmatpush.msra.mxu0 0.0
    %215 = vmatpush.msra.mxu0 0.0
    %216 = vmatpush.msra.mxu0 0.0
    %217 = vmatpush.msra.mxu0 %v197
    %218 = vmatpush.msra.mxu0 %v196
    %219 = vmatpush.msra.mxu0 %v195
    %220 = vmatpush.msra.mxu0 %v194
    %221 = vmatmul.f32.gmra.mxu0 %v203
    %v222 = vpop.f32.mrf.mxu0
    %v223 = vadd.f32 %v200, %v222
    %224 = vdwg.mxu0
    %225 = vst [vmem:[#allocation2] sm:$0xff] %v223
    // Predicated region
    $region26: #{tpu_custom_call.1} parent=1 // pred_check
      _
    $region27: #{tpu_custom_call.1} parent=1 // pred_check_branch
      %227 = sbr.rel (0) target = $region29
    $region28: #{tpu_custom_call.1} parent=1 // pred_region
      %229 = vsyncadd [#allocation3], 0
      %s231 = sshll.u32 [#allocation2], 4
      %s232 = int_to_ptr.vmem [resolvable:$true] %s231
      %s233 = sshll.u32 %s6, 4
      %s234 = int_to_ptr.hbm [resolvable:$true] %s233
      %236 = dma.vmem_to_hbm [thread:$0]  %s232, 128, %s234, [#allocation3]
    $region29: #{tpu_custom_call.1} parent=1 // pred_fallthru
      _
    // Predicated region
    $region30: #{tpu_custom_call.1} parent=1 // pred_check
      _
    $region31: #{tpu_custom_call.1} parent=1 // pred_check_branch
      %238 = sbr.rel (0) target = $region33
    $region32: #{tpu_custom_call.1} parent=1 // pred_region
      %240 = dma.done [#allocation3], 128
    $region33: #{tpu_custom_call.1} parent=1 // pred_fallthru
      _
    %241 = vsyncpa [#allocation3], 1

</llo_original>
